<compile_context>
chip_gen: v5e
topology: v5e:2x2
jax: 0.10.0
libtpu: 0.0.40
codegen_flags: <defaults>
</compile_context>

<pallas_src>
import jax
import jax.numpy as jnp
from jax.experimental import pallas as pl
from jax.experimental.pallas import tpu as pltpu

EMB_DIM = 32       # embedding width of the synthetic perceptual net
PATCH_SIZE = 8     # conv kernel == stride (CLIP-style patchify)
COEF = 1.0

DPAD = 128         # embedding dim padded to one full lane tile
TB = 128           # patches (rows) per grid step


def _loss_kernel(pooled_ref, w_ref, bias_ref, ref_ref, out_ref):
    # pooled_ref: (TB, K)   per-patch pooled features
    # w_ref:      (K, DPAD) fused (w1 @ w2), rows reordered, zero-padded cols
    # bias_ref:   (1, DPAD) fused (b1 @ w2 + b2), zero-padded cols
    # ref_ref:    (TB, DPAD) reference embeddings, zero-padded cols
    # out_ref:    (TB, 1)   per-patch MSE (un-scaled by coef)
    emb = jnp.dot(pooled_ref[...], w_ref[...],
                  preferred_element_type=jnp.float32) + bias_ref[...]
    diff = emb - ref_ref[...]
    # Padded columns are exactly zero on both sides, so summing all DPAD lanes
    # and dividing by EMB_DIM reproduces MSELoss(reduction='none')(...).mean().
    out_ref[...] = jnp.sum(diff * diff, axis=1, keepdims=True) * (1.0 / EMB_DIM)


def init_perceptual_params(key):
    # TODO(synk): CLIP_for_Perceptual is an external pretrained backbone; its
    # weights are replaced by a deterministic synthetic patch-embed network.
    k1, k2, k3, k4 = jax.random.split(key, 4)
    K = 3 * PATCH_SIZE * PATCH_SIZE
    return {
        "w1": jax.random.normal(k1, (K, EMB_DIM), jnp.float32) * 0.05,
        "b1": jax.random.normal(k2, (1, EMB_DIM), jnp.float32) * 0.01,
        "w2": jax.random.normal(k3, (EMB_DIM, EMB_DIM), jnp.float32) * 0.05,
        "b2": jax.random.normal(k4, (1, EMB_DIM), jnp.float32) * 0.01,
    }


def _fold_params(params):
    """Fold the token mean-pool through both linears and pad D -> 128 lanes."""
    ps, D = PATCH_SIZE, EMB_DIM
    W = params["w1"] @ params["w2"]                       # (K, D), rows in (c, i, j) order
    b = params["b1"] @ params["w2"] + params["b2"]        # (1, D)
    # Reorder W rows (c, i, j) -> (i, j, c) so the *batched patch data* never
    # needs a channel transpose (only this tiny weight is permuted).
    W = W.reshape(3, ps, ps, D).transpose(1, 2, 0, 3).reshape(ps * ps * 3, D)
    Wp = jnp.zeros((ps * ps * 3, DPAD), jnp.float32).at[:, :D].set(W)
    bias_p = jnp.zeros((1, DPAD), jnp.float32).at[:, :D].set(b)
    return Wp, bias_p


def patch_semantic_loss_batched(patch_rgb, patch_hw, ref_embeddings, params,
                                coef=COEF):
    """patch_rgb: (B, ph*pw, 3); ref_embeddings: (B, EMB_DIM) -> (B,) losses."""
    ph, pw = patch_hw
    ps = PATCH_SIZE
    # TODO(synk): like the original stand-in, assumes patch_hw is a multiple of
    # PATCH_SIZE (trailing rows/cols would be silently dropped otherwise).
    th, tw = ph // ps, pw // ps
    B = patch_rgb.shape[0]
    K = ps * ps * 3

    Wp, bias_p = _fold_params(params)

    # Mean over tokens commutes with the folded linear layer, so only the
    # per-intra-patch-position pixel mean is needed: pure reshape + mean on the
    # raw (B, ph*pw, 3) layout — no 6-D im2col transpose, no per-token matmul.
    pooled = patch_rgb.astype(jnp.float32).reshape(B, th, ps, tw, ps, 3)
    pooled = pooled.mean(axis=(1, 3)).reshape(B, K)       # rows in (i, j, c) order

    refp = jnp.zeros((B, DPAD), jnp.float32).at[:, :EMB_DIM].set(
        ref_embeddings.astype(jnp.float32))

    # Pad the batch to a multiple of the row tile so the grid divides evenly.
    b_rows = pl.cdiv(B, TB) * TB
    if b_rows != B:
        pooled = jnp.pad(pooled, ((0, b_rows - B), (0, 0)))
        refp = jnp.pad(refp, ((0, b_rows - B), (0, 0)))

    losses = pl.pallas_call(
        _loss_kernel,
        out_shape=jax.ShapeDtypeStruct((b_rows, 1), jnp.float32),
        grid=(b_rows // TB,),
        in_specs=[
            pl.BlockSpec((TB, K), lambda i: (i, 0)),       # pooled features
            pl.BlockSpec((K, DPAD), lambda i: (0, 0)),     # fused weight (resident)
            pl.BlockSpec((1, DPAD), lambda i: (0, 0)),     # fused bias (resident)
            pl.BlockSpec((TB, DPAD), lambda i: (i, 0)),    # reference embeddings
        ],
        out_specs=pl.BlockSpec((TB, 1), lambda i: (i, 0)),
        compiler_params=pltpu.CompilerParams(
            dimension_semantics=("parallel",)),
    )(pooled, Wp, bias_p, refp)

    # coef applied outside the kernel so changing it never retraces the kernel.
    return coef * losses[:B, 0]


def patch_semantic_loss(patch_rgb, patch_hw, ref_patch_embedding, params,
                        coef=COEF):
    """Single-patch forward matching the PyTorch module; returns a scalar."""
    losses = patch_semantic_loss_batched(patch_rgb[None], patch_hw,
                                         ref_patch_embedding[None], params, coef)
    return losses[0]


def _reference_loss_batched(patch_rgb, patch_hw, ref_embs, params, coef=COEF):
    """Unfused pure-JAX replica of the original per-patch module math."""
    ph, pw = patch_hw
    ps = PATCH_SIZE
    th, tw = ph // ps, pw // ps
    B = patch_rgb.shape[0]
    img = jnp.swapaxes(patch_rgb, 1, 2).reshape(B, 3, ph, pw)   # permute(1,0).view(1,3,ph,pw)
    tokens = img.reshape(B, 3, th, ps, tw, ps).transpose(0, 2, 4, 1, 3, 5)
    tokens = tokens.reshape(B, th * tw, 3 * ps * ps)
    h = tokens @ params["w1"] + params["b1"]
    pooled = h.mean(axis=1)
    emb = pooled @ params["w2"] + params["b2"]
    return coef * jnp.mean((emb - ref_embs) ** 2, axis=1)


if __name__ == "__main__":
    key = jax.random.PRNGKey(0)
    k_rgb, k_ref, k_params = jax.random.split(key, 3)

    patch_h, patch_w = 16, 16
    B = 256   # many patches per call: grid=(2,), parallel axis, amortized launch

    # inputs['rgb_instance_fine'] batched over patches: (B, ph*pw, 3)
    patch_rgb = jax.random.uniform(k_rgb, (B, patch_h * patch_w, 3), jnp.float32)
    # batch['ref_patch_embedding'] per patch: (B, EMB_DIM)
    ref_embs = jax.random.normal(k_ref, (B, EMB_DIM), jnp.float32)

    params = init_perceptual_params(k_params)

    batched = jax.jit(patch_semantic_loss_batched, static_argnums=(1,))
    losses = jax.block_until_ready(
        batched(patch_rgb, (patch_h, patch_w), ref_embs, params, COEF))

    ref = _reference_loss_batched(patch_rgb, (patch_h, patch_w), ref_embs,
                                  params, COEF)
    assert losses.shape == (B,)
    assert jnp.allclose(losses, ref, rtol=1e-4, atol=1e-6), (losses[:4], ref[:4])

    # Single-patch path (matches the original module's one-patch forward).
    single = jax.block_until_ready(
        patch_semantic_loss(patch_rgb[0], (patch_h, patch_w), ref_embs[0],
                            params, COEF))
    assert jnp.allclose(single, ref[0], rtol=1e-4, atol=1e-6), (single, ref[0])

    print("KERNEL_OK")
</pallas_src>

<mosaic_0001>
module attributes {stable_mosaic.version = 11 : i64} {
  func.func @_loss_kernel(%arg0: i32, %arg1: memref<128x192xf32, #tpu.memory_space<vmem>>, %arg2: memref<192x128xf32, #tpu.memory_space<vmem>>, %arg3: memref<1x128xf32, #tpu.memory_space<vmem>>, %arg4: memref<128x128xf32, #tpu.memory_space<vmem>>, %arg5: memref<128x1xf32, #tpu.memory_space<vmem>>) attributes {dimension_semantics = [#tpu.dimension_semantics<parallel>], iteration_bounds = array<i64: 2>, scalar_prefetch = 0 : i64, scratch_operands = 0 : i64, tpu.core_type = #tpu.core_type<tc>, window_params = [{transform_indices = @transform_0, window_bounds = array<i64: 128, 192>}, {pipeline_mode = #tpu.pipeline_mode<synchronous>, transform_indices = @transform_1, window_bounds = array<i64: 192, 128>}, {pipeline_mode = #tpu.pipeline_mode<synchronous>, transform_indices = @transform_2, window_bounds = array<i64: 1, 128>}, {transform_indices = @transform_3, window_bounds = array<i64: 128, 128>}, {transform_indices = @transform_4, window_bounds = array<i64: 128, 1>}]} {
    %c0 = arith.constant 0 : index
    %c0_0 = arith.constant 0 : index
    %0 = vector.load %arg1[%c0, %c0_0] : memref<128x192xf32, #tpu.memory_space<vmem>>, vector<128x192xf32>
    %c0_1 = arith.constant 0 : index
    %c0_2 = arith.constant 0 : index
    %1 = vector.load %arg2[%c0_1, %c0_2] : memref<192x128xf32, #tpu.memory_space<vmem>>, vector<192x128xf32>
    %cst = arith.constant dense<0.000000e+00> : vector<128x128xf32>
    %2 = tpu.matmul %0, %1, %cst {dimension_numbers = #tpu.dot_dimension_numbers<[1], [0], [0], [1], [0, 0, 1, 1], [], []>} : vector<128x192xf32>, vector<192x128xf32>, vector<128x128xf32> -> vector<128x128xf32>
    %c0_3 = arith.constant 0 : index
    %c0_4 = arith.constant 0 : index
    %3 = vector.load %arg3[%c0_3, %c0_4] : memref<1x128xf32, #tpu.memory_space<vmem>>, vector<1x128xf32>
    %4 = vector.broadcast %3 : vector<1x128xf32> to vector<128x128xf32>
    %5 = arith.addf %2, %4 : vector<128x128xf32>
    %c0_5 = arith.constant 0 : index
    %c0_6 = arith.constant 0 : index
    %6 = vector.load %arg4[%c0_5, %c0_6] : memref<128x128xf32, #tpu.memory_space<vmem>>, vector<128x128xf32>
    %7 = arith.subf %5, %6 : vector<128x128xf32>
    %8 = arith.mulf %7, %7 : vector<128x128xf32>
    %cst_7 = arith.constant dense<0.000000e+00> : vector<128xf32>
    %9 = vector.multi_reduction <add>, %8, %cst_7 [1] : vector<128x128xf32> to vector<128xf32>
    %10 = vector.shape_cast %9 : vector<128xf32> to vector<128x1xf32>
    %cst_8 = arith.constant 3.125000e-02 : f32
    %11 = vector.broadcast %cst_8 : f32 to vector<128x1xf32>
    %12 = arith.mulf %10, %11 : vector<128x1xf32>
    %c0_9 = arith.constant 0 : index
    %c0_10 = arith.constant 0 : index
    %13 = vector.load %arg5[%c0_9, %c0_10] : memref<128x1xf32, #tpu.memory_space<vmem>>, vector<128x1xf32>
    tpu.vector_store %arg5[%c0_9, %c0_10], %12 {strides = array<i32>} : memref<128x1xf32, #tpu.memory_space<vmem>>, vector<128x1xf32>,
    return
  }
  func.func @transform_0(%arg0: i32) -> (i32, i32) {
    %c0_i32 = arith.constant 0 : i32
    %c0_i32_0 = arith.constant 0 : i32
    return %arg0, %c0_i32 : i32, i32
  }
  func.func @transform_1(%arg0: i32) -> (i32, i32) {
    %c0_i32 = arith.constant 0 : i32
    %c0_i32_0 = arith.constant 0 : i32
    %c0_i32_1 = arith.constant 0 : i32
    return %c0_i32, %c0_i32_0 : i32, i32
  }
  func.func @transform_2(%arg0: i32) -> (i32, i32) {
    %c0_i32 = arith.constant 0 : i32
    %c0_i32_0 = arith.constant 0 : i32
    %c0_i32_1 = arith.constant 0 : i32
    return %c0_i32, %c0_i32_0 : i32, i32
  }
  func.func @transform_3(%arg0: i32) -> (i32, i32) {
    %c0_i32 = arith.constant 0 : i32
    %c0_i32_0 = arith.constant 0 : i32
    return %arg0, %c0_i32 : i32, i32
  }
  func.func @transform_4(%arg0: i32) -> (i32, i32) {
    %c0_i32 = arith.constant 0 : i32
    %c0_i32_0 = arith.constant 0 : i32
    return %arg0, %c0_i32 : i32, i32
  }
}

</mosaic_0001>

<llo_original>
// kernel: patch_semantic_loss_batched.1
$region0: #{patch_semantic_loss_batched.1}
  #allocation0 [shape = 'u32[]', space=smem, size = 0x4, offset = 0x4, fixed_abs, tag = 'smem constant byte address 0x4 - core index']
  #allocation1 [shape = 'u32[72,128]{1,0:T(1,128)}', space=vmem, size = 0x9000, scoped, tag = 'internal scratch']
  %s0 = inlined_call_operand.vmem [shape: f32[256,192], index: 0, kind: input, shape index: {}]
  %s1 = inlined_call_operand.vmem [shape: f32[192,128], index: 1, kind: input, shape index: {}]
  %s2 = inlined_call_operand.vmem [shape: f32[1,128], index: 2, kind: input, shape index: {}]
  %s3 = inlined_call_operand.vmem [shape: f32[256,128], index: 3, kind: input, shape index: {}]
  %s4 = inlined_call_operand.vmem [shape: f32[256,1], index: 4, kind: output, shape index: {}]
  %s5 = sld [smem:[#allocation0]]
  $region49: #{patch_semantic_loss_batched.1} parent=0
    _
  %s7 = ssub.s32 1, %s5
  %s8 = scalar_select 0, %s7, %s5
  loop: start=0, step=1, limit=4
  $region2: #{patch_semantic_loss_batched.1} parent=0 // loop_pre_header
    _
  $region3: #{patch_semantic_loss_batched.1} parent=0 // loop_header
    %s10 = sphi 0, %s14
    %p11 = scmp.ge.s32.totalorder %s10, 4
    %s20 = sphi 0, %s22
    %s23 = sphi 0, %s20
    %s24 = sphi 0, %s23
    %s40 = sphi 0, %s24
    %s44 = sphi 0, %s44
    %s46 = sphi 0, %s44
    %s47 = sphi 0, %s46
    %s61 = sphi 0, %s47
    %s65 = sphi 0, %s65
    %s67 = sphi 0, %s65
    %s68 = sphi 0, %s67
    %s82 = sphi 0, %s68
    %s88 = sphi 0, %s90
    %s91 = sphi 0, %s88
    %s92 = sphi 0, %s91
    %s108 = sphi 0, %s92
    %s114 = sphi 0, %s116
    %s117 = sphi 0, %s114
    %s118 = sphi 0, %s117
    %s134 = sphi 0, %s118
  $region4: #{patch_semantic_loss_batched.1} parent=0 // loop_header_branch
    %13 = sbr.rel (%p11) target = $region8
  $region5: #{patch_semantic_loss_batched.1} parent=0 // loop_body
    %s15 = ssub.s32 %s10, 1
    %s16 = ssub.s32 %s10, 2
    %s17 = sadd.s32 %s10, 1
    %s18 = ssub.s32 %s10, %s17
    %p19 = scmp.eq.s32.totalorder %s18, 0
    %s21 = sadd.s32 %s20, 1
    %s22 = scalar_select %p19, %s20, %s21
    %p25 = pneg %p19
    %p26 = scmp.eq.s32.totalorder %s10, 1
    %p27 = por %p25, %p26
    %p28 = scmp.ne.s32.totalorder %s20, %s23
    %p29 = scmp.eq.s32.totalorder %s10, 0
    %p30 = por %p28, %p29
    %p31 = scmp.ne.s32.totalorder %s20, %s23
    %p32 = scmp.eq.s32.totalorder %s15, 1
    %p33 = por %p31, %p32
    %p34 = scmp.ne.s32.totalorder %s23, %s24
    %p35 = scmp.eq.s32.totalorder %s15, 0
    %p36 = por %p34, %p35
    %p37 = scmp.ne.s32.totalorder %s23, %s24
    %p38 = scmp.eq.s32.totalorder %s16, 1
    %p39 = por %p37, %p38
    %p41 = scmp.ne.s32.totalorder %s24, %s40
    %p42 = scmp.eq.s32.totalorder %s16, 0
    %p43 = por %p41, %p42
    %s45 = sadd.s32 %s44, 1
    %p48 = scmp.eq.s32.totalorder %s10, 1
    %p49 = scmp.ne.s32.totalorder %s44, %s46
    %p50 = scmp.eq.s32.totalorder %s10, 0
    %p51 = por %p49, %p50
    %p52 = scmp.ne.s32.totalorder %s44, %s46
    %p53 = scmp.eq.s32.totalorder %s15, 1
    %p54 = por %p52, %p53
    %p55 = scmp.ne.s32.totalorder %s46, %s47
    %p56 = scmp.eq.s32.totalorder %s15, 0
    %p57 = por %p55, %p56
    %p58 = scmp.ne.s32.totalorder %s46, %s47
    %p59 = scmp.eq.s32.totalorder %s16, 1
    %p60 = por %p58, %p59
    %p62 = scmp.ne.s32.totalorder %s47, %s61
    %p63 = scmp.eq.s32.totalorder %s16, 0
    %p64 = por %p62, %p63
    %s66 = sadd.s32 %s65, 1
    %p69 = scmp.eq.s32.totalorder %s10, 1
    %p70 = scmp.ne.s32.totalorder %s65, %s67
    %p71 = scmp.eq.s32.totalorder %s10, 0
    %p72 = por %p70, %p71
    %p73 = scmp.ne.s32.totalorder %s65, %s67
    %p74 = scmp.eq.s32.totalorder %s15, 1
    %p75 = por %p73, %p74
    %p76 = scmp.ne.s32.totalorder %s67, %s68
    %p77 = scmp.eq.s32.totalorder %s15, 0
    %p78 = por %p76, %p77
    %p79 = scmp.ne.s32.totalorder %s67, %s68
    %p80 = scmp.eq.s32.totalorder %s16, 1
    %p81 = por %p79, %p80
    %p83 = scmp.ne.s32.totalorder %s68, %s82
    %p84 = scmp.eq.s32.totalorder %s16, 0
    %p85 = por %p83, %p84
    %s86 = ssub.s32 %s10, %s17
    %p87 = scmp.eq.s32.totalorder %s86, 0
    %s89 = sadd.s32 %s88, 1
    %s90 = scalar_select %p87, %s88, %s89
    %p93 = pneg %p87
    %p94 = scmp.eq.s32.totalorder %s10, 1
    %p95 = por %p93, %p94
    %p96 = scmp.ne.s32.totalorder %s88, %s91
    %p97 = scmp.eq.s32.totalorder %s10, 0
    %p98 = por %p96, %p97
    %p99 = scmp.ne.s32.totalorder %s88, %s91
    %p100 = scmp.eq.s32.totalorder %s15, 1
    %p101 = por %p99, %p100
    %p102 = scmp.ne.s32.totalorder %s91, %s92
    %p103 = scmp.eq.s32.totalorder %s15, 0
    %p104 = por %p102, %p103
    %p105 = scmp.ne.s32.totalorder %s91, %s92
    %p106 = scmp.eq.s32.totalorder %s16, 1
    %p107 = por %p105, %p106
    %p109 = scmp.ne.s32.totalorder %s92, %s108
    %p110 = scmp.eq.s32.totalorder %s16, 0
    %p111 = por %p109, %p110
    %s112 = ssub.s32 %s10, %s17
    %p113 = scmp.eq.s32.totalorder %s112, 0
    %s115 = sadd.s32 %s114, 1
    %s116 = scalar_select %p113, %s114, %s115
    %p119 = pneg %p113
    %p120 = scmp.eq.s32.totalorder %s10, 1
    %p121 = por %p119, %p120
    %p122 = scmp.ne.s32.totalorder %s114, %s117
    %p123 = scmp.eq.s32.totalorder %s10, 0
    %p124 = por %p122, %p123
    %p125 = scmp.ne.s32.totalorder %s114, %s117
    %p126 = scmp.eq.s32.totalorder %s15, 1
    %p127 = por %p125, %p126
    %p128 = scmp.ne.s32.totalorder %s117, %s118
    %p129 = scmp.eq.s32.totalorder %s15, 0
    %p130 = por %p128, %p129
    %p131 = scmp.ne.s32.totalorder %s117, %s118
    %p132 = scmp.eq.s32.totalorder %s16, 1
    %p133 = por %p131, %p132
    %p135 = scmp.ne.s32.totalorder %s118, %s134
    %p136 = scmp.eq.s32.totalorder %s16, 0
    %p137 = por %p135, %p136
    %p138 = scmp.le.s32.totalorder 1, %s10
    %p139 = scmp.lt.s32.totalorder %s10, 3
    %p140 = pnand %p138, %p139
    %p141 = pneg %p140
    // Predicated region
    $region9: #{patch_semantic_loss_batched.1} parent=5 // pred_check
      _
    $region10: #{patch_semantic_loss_batched.1} parent=5 // pred_check_branch
      %143 = sbr.rel (%p140) target = $region12
    $region11: #{patch_semantic_loss_batched.1} parent=5 // pred_region
      %s144 = ssub.s32 %s10, 1
      // Predicated region
      $region13: #{patch_semantic_loss_batched.1} parent=11 // pred_check
        %p145 = pneg %p57
      $region14: #{patch_semantic_loss_batched.1} parent=11 // pred_check_branch
        %147 = sbr.rel (%p145) target = $region16
      $region15: #{patch_semantic_loss_batched.1} parent=11 // pred_region
        _
      $region16: #{patch_semantic_loss_batched.1} parent=11 // pred_fallthru
        _
      // Predicated region
      $region17: #{patch_semantic_loss_batched.1} parent=11 // pred_check
        %p148 = pneg %p78
      $region18: #{patch_semantic_loss_batched.1} parent=11 // pred_check_branch
        %150 = sbr.rel (%p148) target = $region20
      $region19: #{patch_semantic_loss_batched.1} parent=11 // pred_region
        _
      $region20: #{patch_semantic_loss_batched.1} parent=11 // pred_fallthru
        _
    $region12: #{patch_semantic_loss_batched.1} parent=5 // pred_fallthru
      _
    %p151 = scmp.lt.s32.totalorder %s10, 2
    // Predicated region
    $region21: #{patch_semantic_loss_batched.1} parent=5 // pred_check
      %p152 = pneg %p151
    $region22: #{patch_semantic_loss_batched.1} parent=5 // pred_check_branch
      %154 = sbr.rel (%p152) target = $region24
    $region23: #{patch_semantic_loss_batched.1} parent=5 // pred_region
      // Predicated region
      $region25: #{patch_semantic_loss_batched.1} parent=23 // pred_check
        %p155 = pneg %p30
      $region26: #{patch_semantic_loss_batched.1} parent=23 // pred_check_branch
        %157 = sbr.rel (%p155) target = $region28
      $region27: #{patch_semantic_loss_batched.1} parent=23 // pred_region
        %s158 = smul.u32 16, %s10
        %p159 = scmp.lt.s32.totalorder %s158, 31
        %s160 = scalar_select %p159, %s158, 31
        %s161 = smul.addr %s160, 2
        %s162 = smul.addr %s161, 8
        %s163 = scalar_lea.vmem %s0, %s162
        %s164 = smul.u32 16, %s10
      $region28: #{patch_semantic_loss_batched.1} parent=23 // pred_fallthru
        _
      // Predicated region
      $region29: #{patch_semantic_loss_batched.1} parent=23 // pred_check
        %p165 = pneg %p98
      $region30: #{patch_semantic_loss_batched.1} parent=23 // pred_check_branch
        %167 = sbr.rel (%p165) target = $region32
      $region31: #{patch_semantic_loss_batched.1} parent=23 // pred_region
        %s168 = smul.u32 16, %s10
        %p169 = scmp.lt.s32.totalorder %s168, 31
        %s170 = scalar_select %p169, %s168, 31
        %s171 = smul.addr %s170, 8
        %s172 = scalar_lea.vmem %s3, %s171
        %s173 = smul.u32 16, %s10
      $region32: #{patch_semantic_loss_batched.1} parent=23 // pred_fallthru
        _
    $region24: #{patch_semantic_loss_batched.1} parent=5 // pred_fallthru
      _
    %p174 = scmp.le.s32.totalorder 1, %s10
    %p175 = scmp.lt.s32.totalorder %s10, 3
    %p176 = pnand %p174, %p175
    %p177 = pneg %p176
    // Predicated region
    $region33: #{patch_semantic_loss_batched.1} parent=5 // pred_check
      _
    $region34: #{patch_semantic_loss_batched.1} parent=5 // pred_check_branch
      %179 = sbr.rel (%p176) target = $region36
    $region35: #{patch_semantic_loss_batched.1} parent=5 // pred_region
      %s180 = ssub.s32 %s10, 1
      %s181 = smul.u32 16, %s15
      %p182 = scmp.lt.s32.totalorder %s181, 31
      %s183 = scalar_select %p182, %s181, 31
      %s184 = smul.addr %s183, 2
      %s185 = smul.addr %s184, 8
      %s186 = scalar_lea.vmem %s0, %s185
      %p187 = pneg %p36
      %p188 = pneg %p33
      %p189 = pneg %p57
      %p190 = pneg %p54
      %p191 = pneg %p78
      %p192 = pneg %p75
      %s193 = smul.u32 16, %s15
      %p194 = scmp.lt.s32.totalorder %s193, 31
      %s195 = scalar_select %p194, %s193, 31
      %s196 = smul.addr %s195, 8
      %s197 = scalar_lea.vmem %s3, %s196
      %p198 = pneg %p104
      %p199 = pneg %p101
      %p200 = pneg %p130
      %p201 = pneg %p127
      %s202 = smul.u32 16, %s15
      %p203 = scmp.lt.s32.totalorder %s202, 31
      %s204 = scalar_select %p203, %s202, 31
      %s205 = smul.addr %s204, 8
      %s206 = scalar_lea.vmem %s4, %s205
      %s207 = smul.u32 16, %s15
      %p208 = scmp.lt.s32.totalorder %s207, 31
      %s209 = scalar_select %p208, %s207, 31
      %s210 = smul.addr %s209, 2
      %s211 = smul.addr %s210, 8
      %s212 = scalar_lea.vmem %s0, %s211
      %s213 = smul.u32 16, %s15
      %s214 = smul.u32 16, %s15
      %p215 = scmp.lt.s32.totalorder %s214, 31
      %s216 = scalar_select %p215, %s214, 31
      %s217 = smul.addr %s216, 8
      %s218 = scalar_lea.vmem %s3, %s217
      %s219 = smul.u32 16, %s15
      %s220 = smul.u32 16, %s15
      %p221 = scmp.lt.s32.totalorder %s220, 31
      %s222 = scalar_select %p221, %s220, 31
      %s223 = smul.addr %s222, 8
      %s224 = scalar_lea.vmem %s4, %s223
      %s225 = smul.u32 16, %s15
      %v226 = vld [vmem:[%s212] sm:$0xff]
      %v227 = vld [vmem:[%s212 + $0x8] sm:$0xff]
      %v228 = vld [vmem:[%s212 + $0x10] sm:$0xff]
      %v229 = vld [vmem:[%s212 + $0x18] sm:$0xff]
      %v230 = vld [vmem:[%s212 + $0x20] sm:$0xff]
      %v231 = vld [vmem:[%s212 + $0x28] sm:$0xff]
      %v232 = vld [vmem:[%s212 + $0x30] sm:$0xff]
      %v233 = vld [vmem:[%s212 + $0x38] sm:$0xff]
      %v234 = vld [vmem:[%s212 + $0x40] sm:$0xff]
      %v235 = vld [vmem:[%s212 + $0x48] sm:$0xff]
      %v236 = vld [vmem:[%s212 + $0x50] sm:$0xff]
      %v237 = vld [vmem:[%s212 + $0x58] sm:$0xff]
      %v238 = vld [vmem:[%s212 + $0x60] sm:$0xff]
      %v239 = vld [vmem:[%s212 + $0x68] sm:$0xff]
      %v240 = vld [vmem:[%s212 + $0x70] sm:$0xff]
      %v241 = vld [vmem:[%s212 + $0x78] sm:$0xff]
      %v242 = vld [vmem:[%s212 + $0x80] sm:$0xff]
      %v243 = vld [vmem:[%s212 + $0x88] sm:$0xff]
      %v244 = vld [vmem:[%s212 + $0x90] sm:$0xff]
      %v245 = vld [vmem:[%s212 + $0x98] sm:$0xff]
      %v246 = vld [vmem:[%s212 + $0xa0] sm:$0xff]
      %v247 = vld [vmem:[%s212 + $0xa8] sm:$0xff]
      %v248 = vld [vmem:[%s212 + $0xb0] sm:$0xff]
      %v249 = vld [vmem:[%s212 + $0xb8] sm:$0xff]
      %v250 = vld [vmem:[%s212 + $0xc0] sm:$0xff]
      %v251 = vld [vmem:[%s212 + $0xc8] sm:$0xff]
      %v252 = vld [vmem:[%s212 + $0xd0] sm:$0xff]
      %v253 = vld [vmem:[%s212 + $0xd8] sm:$0xff]
      %v254 = vld [vmem:[%s212 + $0xe0] sm:$0xff]
      %v255 = vld [vmem:[%s212 + $0xe8] sm:$0xff]
      %v256 = vld [vmem:[%s212 + $0xf0] sm:$0xff]
      %v257 = vld [vmem:[%s212 + $0xf8] sm:$0xff]
      %v258 = vld [vmem:[%s1] sm:$0xff]
      %v259 = vld [vmem:[%s1 + $0x8] sm:$0xff]
      %v260 = vld [vmem:[%s1 + $0x10] sm:$0xff]
      %v261 = vld [vmem:[%s1 + $0x18] sm:$0xff]
      %v262 = vld [vmem:[%s1 + $0x20] sm:$0xff]
      %v263 = vld [vmem:[%s1 + $0x28] sm:$0xff]
      %v264 = vld [vmem:[%s1 + $0x30] sm:$0xff]
      %v265 = vld [vmem:[%s1 + $0x38] sm:$0xff]
      %v266 = vld [vmem:[%s1 + $0x40] sm:$0xff]
      %v267 = vld [vmem:[%s1 + $0x48] sm:$0xff]
      %v268 = vld [vmem:[%s1 + $0x50] sm:$0xff]
      %v269 = vld [vmem:[%s1 + $0x58] sm:$0xff]
      %v270 = vld [vmem:[%s1 + $0x60] sm:$0xff]
      %v271 = vld [vmem:[%s1 + $0x68] sm:$0xff]
      %v272 = vld [vmem:[%s1 + $0x70] sm:$0xff]
      %v273 = vld [vmem:[%s1 + $0x78] sm:$0xff]
      %v274 = vld [vmem:[%s1 + $0x80] sm:$0xff]
      %v275 = vld [vmem:[%s1 + $0x88] sm:$0xff]
      %v276 = vld [vmem:[%s1 + $0x90] sm:$0xff]
      %v277 = vld [vmem:[%s1 + $0x98] sm:$0xff]
      %v278 = vld [vmem:[%s1 + $0xa0] sm:$0xff]
      %v279 = vld [vmem:[%s1 + $0xa8] sm:$0xff]
      %v280 = vld [vmem:[%s1 + $0xb0] sm:$0xff]
      %v281 = vld [vmem:[%s1 + $0xb8] sm:$0xff]
      %v282 = vld [vmem:[%s2] sm:$0x1]
      %v284 = vperm.slane %v282, 0
      %vm286 = vcmask 523264
      %v288 = vsel %vm286, %v227, 0
      %v291 = vsel %vm286, %v229, 0
      %v294 = vsel %vm286, %v231, 0
      %v297 = vsel %vm286, %v233, 0
      %v300 = vsel %vm286, %v235, 0
      %v303 = vsel %vm286, %v237, 0
      %v306 = vsel %vm286, %v239, 0
      %v309 = vsel %vm286, %v241, 0
      %v312 = vsel %vm286, %v243, 0
      %v315 = vsel %vm286, %v245, 0
      %v318 = vsel %vm286, %v247, 0
      %v321 = vsel %vm286, %v249, 0
      %v324 = vsel %vm286, %v251, 0
      %v327 = vsel %vm286, %v253, 0
      %v330 = vsel %vm286, %v255, 0
      %v333 = vsel %vm286, %v257, 0
      %335 = vmatpush.msra.mxu0 %v273
      %336 = vmatpush.msra.mxu0 %v272
      %337 = vmatpush.msra.mxu0 %v271
      %338 = vmatpush.msra.mxu0 %v270
      %339 = vmatpush.msra.mxu0 %v269
      %340 = vmatpush.msra.mxu0 %v268
      %341 = vmatpush.msra.mxu0 %v267
      %342 = vmatpush.msra.mxu0 %v266
      %343 = vmatpush.msra.mxu0 %v265
      %344 = vmatpush.msra.mxu0 %v264
      %345 = vmatpush.msra.mxu0 %v263
      %346 = vmatpush.msra.mxu0 %v262
      %347 = vmatpush.msra.mxu0 %v261
      %348 = vmatpush.msra.mxu0 %v260
      %349 = vmatpush.msra.mxu0 %v259
      %350 = vmatpush.msra.mxu0 %v258
      %351 = vmatmul.f32.gmra.mxu0 %v226
      %v352 = vpop.f32.mrf.mxu0
      %v353 = vadd.f32 %v284, %v352
      %354 = vmatmul.f32.gmra.mxu0 %v228
      %v355 = vpop.f32.mrf.mxu0
      %v356 = vadd.f32 %v284, %v355
      %357 = vmatmul.f32.gmra.mxu0 %v230
      %v358 = vpop.f32.mrf.mxu0
      %v359 = vadd.f32 %v284, %v358
      %360 = vmatmul.f32.gmra.mxu0 %v232
      %v361 = vpop.f32.mrf.mxu0
      %v362 = vadd.f32 %v284, %v361
      %363 = vmatmul.f32.gmra.mxu0 %v234
      %v364 = vpop.f32.mrf.mxu0
      %v365 = vadd.f32 %v284, %v364
      %366 = vmatmul.f32.gmra.mxu0 %v236
      %v367 = vpop.f32.mrf.mxu0
      %v368 = vadd.f32 %v284, %v367
      %369 = vmatmul.f32.gmra.mxu0 %v238
      %v370 = vpop.f32.mrf.mxu0
      %v371 = vadd.f32 %v284, %v370
      %372 = vmatmul.f32.gmra.mxu0 %v240
      %v373 = vpop.f32.mrf.mxu0
      %v374 = vadd.f32 %v284, %v373
      %375 = vmatmul.f32.gmra.mxu0 %v242
      %v376 = vpop.f32.mrf.mxu0
      %v377 = vadd.f32 %v284, %v376
      %378 = vmatmul.f32.gmra.mxu0 %v244
      %v379 = vpop.f32.mrf.mxu0
      %v380 = vadd.f32 %v284, %v379
      %381 = vmatmul.f32.gmra.mxu0 %v246
      %v382 = vpop.f32.mrf.mxu0
      %v383 = vadd.f32 %v284, %v382
      %384 = vmatmul.f32.gmra.mxu0 %v248
      %v385 = vpop.f32.mrf.mxu0
      %v386 = vadd.f32 %v284, %v385
      %387 = vmatmul.f32.gmra.mxu0 %v250
      %v388 = vpop.f32.mrf.mxu0
      %v389 = vadd.f32 %v284, %v388
      %390 = vmatmul.f32.gmra.mxu0 %v252
      %v391 = vpop.f32.mrf.mxu0
      %v392 = vadd.f32 %v284, %v391
      %393 = vmatmul.f32.gmra.mxu0 %v254
      %v394 = vpop.f32.mrf.mxu0
      %v395 = vadd.f32 %v284, %v394
      %396 = vmatmul.f32.gmra.mxu0 %v256
      %v397 = vpop.f32.mrf.mxu0
      %v398 = vadd.f32 %v284, %v397
      %399 = vdwg.mxu0
      %400 = vmatpush.msra.mxu0 0.0
      %401 = vmatpush.msra.mxu0 0.0
      %402 = vmatpush.msra.mxu0 0.0
      %403 = vmatpush.msra.mxu0 0.0
      %404 = vmatpush.msra.mxu0 0.0
      %405 = vmatpush.msra.mxu0 0.0
      %406 = vmatpush.msra.mxu0 0.0
      %407 = vmatpush.msra.mxu0 0.0
      %408 = vmatpush.msra.mxu0 %v281
      %409 = vmatpush.msra.mxu0 %v280
      %410 = vmatpush.msra.mxu0 %v279
      %411 = vmatpush.msra.mxu0 %v278
      %412 = vmatpush.msra.mxu0 %v277
      %413 = vmatpush.msra.mxu0 %v276
      %414 = vmatpush.msra.mxu0 %v275
      %415 = vmatpush.msra.mxu0 %v274
      %416 = vmatmul.f32.gmra.mxu0 %v288
      %v417 = vpop.f32.mrf.mxu0
      %v418 = vadd.f32 %v353, %v417
      %419 = vmatmul.f32.gmra.mxu0 %v291
      %v420 = vpop.f32.mrf.mxu0
      %v421 = vadd.f32 %v356, %v420
      %422 = vmatmul.f32.gmra.mxu0 %v294
      %v423 = vpop.f32.mrf.mxu0
      %v424 = vadd.f32 %v359, %v423
      %425 = vmatmul.f32.gmra.mxu0 %v297
      %v426 = vpop.f32.mrf.mxu0
      %v427 = vadd.f32 %v362, %v426
      %428 = vmatmul.f32.gmra.mxu0 %v300
      %v429 = vpop.f32.mrf.mxu0
      %v430 = vadd.f32 %v365, %v429
      %431 = vmatmul.f32.gmra.mxu0 %v303
      %v432 = vpop.f32.mrf.mxu0
      %v433 = vadd.f32 %v368, %v432
      %434 = vmatmul.f32.gmra.mxu0 %v306
      %v435 = vpop.f32.mrf.mxu0
      %v436 = vadd.f32 %v371, %v435
      %437 = vmatmul.f32.gmra.mxu0 %v309
      %v438 = vpop.f32.mrf.mxu0
      %v439 = vadd.f32 %v374, %v438
      %440 = vmatmul.f32.gmra.mxu0 %v312
      %v441 = vpop.f32.mrf.mxu0
      %v442 = vadd.f32 %v377, %v441
      %443 = vmatmul.f32.gmra.mxu0 %v315
      %v444 = vpop.f32.mrf.mxu0
      %v445 = vadd.f32 %v380, %v444
      %446 = vmatmul.f32.gmra.mxu0 %v318
      %v447 = vpop.f32.mrf.mxu0
      %v448 = vadd.f32 %v383, %v447
      %449 = vmatmul.f32.gmra.mxu0 %v321
      %v450 = vpop.f32.mrf.mxu0
      %v451 = vadd.f32 %v386, %v450
      %452 = vmatmul.f32.gmra.mxu0 %v324
      %v453 = vpop.f32.mrf.mxu0
      %v454 = vadd.f32 %v389, %v453
      %455 = vmatmul.f32.gmra.mxu0 %v327
      %v456 = vpop.f32.mrf.mxu0
      %v457 = vadd.f32 %v392, %v456
      %458 = vmatmul.f32.gmra.mxu0 %v330
      %v459 = vpop.f32.mrf.mxu0
      %v460 = vadd.f32 %v395, %v459
      %461 = vmatmul.f32.gmra.mxu0 %v333
      %v462 = vpop.f32.mrf.mxu0
      %v463 = vadd.f32 %v398, %v462
      %464 = vdwg.mxu0
      %v465 = vld [vmem:[%s218] sm:$0xff]
      %v466 = vld [vmem:[%s218 + $0x8] sm:$0xff]
      %v467 = vld [vmem:[%s218 + $0x10] sm:$0xff]
      %v468 = vld [vmem:[%s218 + $0x18] sm:$0xff]
      %v469 = vld [vmem:[%s218 + $0x20] sm:$0xff]
      %v470 = vld [vmem:[%s218 + $0x28] sm:$0xff]
      %v471 = vld [vmem:[%s218 + $0x30] sm:$0xff]
      %v472 = vld [vmem:[%s218 + $0x38] sm:$0xff]
      %v473 = vld [vmem:[%s218 + $0x40] sm:$0xff]
      %v474 = vld [vmem:[%s218 + $0x48] sm:$0xff]
      %v475 = vld [vmem:[%s218 + $0x50] sm:$0xff]
      %v476 = vld [vmem:[%s218 + $0x58] sm:$0xff]
      %v477 = vld [vmem:[%s218 + $0x60] sm:$0xff]
      %v478 = vld [vmem:[%s218 + $0x68] sm:$0xff]
      %v479 = vld [vmem:[%s218 + $0x70] sm:$0xff]
      %v480 = vld [vmem:[%s218 + $0x78] sm:$0xff]
      %v481 = vsub.f32 %v418, %v465
      %v482 = vsub.f32 %v421, %v466
      %v483 = vsub.f32 %v424, %v467
      %v484 = vsub.f32 %v427, %v468
      %v485 = vsub.f32 %v430, %v469
      %v486 = vsub.f32 %v433, %v470
      %v487 = vsub.f32 %v436, %v471
      %v488 = vsub.f32 %v439, %v472
      %v489 = vsub.f32 %v442, %v473
      %v490 = vsub.f32 %v445, %v474
      %v491 = vsub.f32 %v448, %v475
      %v492 = vsub.f32 %v451, %v476
      %v493 = vsub.f32 %v454, %v477
      %v494 = vsub.f32 %v457, %v478
      %v495 = vsub.f32 %v460, %v479
      %v496 = vsub.f32 %v463, %v480
      %v497 = vmul.f32 %v481, %v481
      %v498 = vmul.f32 %v482, %v482
      %v499 = vmul.f32 %v483, %v483
      %v500 = vmul.f32 %v484, %v484
      %v501 = vmul.f32 %v485, %v485
      %v502 = vmul.f32 %v486, %v486
      %v503 = vmul.f32 %v487, %v487
      %v504 = vmul.f32 %v488, %v488
      %v505 = vmul.f32 %v489, %v489
      %v506 = vmul.f32 %v490, %v490
      %v507 = vmul.f32 %v491, %v491
      %v508 = vmul.f32 %v492, %v492
      %v509 = vmul.f32 %v493, %v493
      %v510 = vmul.f32 %v494, %v494
      %v511 = vmul.f32 %v495, %v495
      %v512 = vmul.f32 %v496, %v496
      %513 = vadd.xlane.f32.xlu0 %v497
      %v514 = vpop.xlane.xlu0 %513
      %515 = vadd.xlane.f32.xlu0 %v498
      %v516 = vpop.xlane.xlu0 %515
      %517 = vadd.xlane.f32.xlu0 %v499
      %v518 = vpop.xlane.xlu0 %517
      %519 = vadd.xlane.f32.xlu0 %v500
      %v520 = vpop.xlane.xlu0 %519
      %521 = vadd.xlane.f32.xlu0 %v501
      %v522 = vpop.xlane.xlu0 %521
      %523 = vadd.xlane.f32.xlu0 %v502
      %v524 = vpop.xlane.xlu0 %523
      %525 = vadd.xlane.f32.xlu0 %v503
      %v526 = vpop.xlane.xlu0 %525
      %527 = vadd.xlane.f32.xlu0 %v504
      %v528 = vpop.xlane.xlu0 %527
      %529 = vadd.xlane.f32.xlu0 %v505
      %v530 = vpop.xlane.xlu0 %529
      %531 = vadd.xlane.f32.xlu0 %v506
      %v532 = vpop.xlane.xlu0 %531
      %533 = vadd.xlane.f32.xlu0 %v507
      %v534 = vpop.xlane.xlu0 %533
      %535 = vadd.xlane.f32.xlu0 %v508
      %v536 = vpop.xlane.xlu0 %535
      %537 = vadd.xlane.f32.xlu0 %v509
      %v538 = vpop.xlane.xlu0 %537
      %539 = vadd.xlane.f32.xlu0 %v510
      %v540 = vpop.xlane.xlu0 %539
      %541 = vadd.xlane.f32.xlu0 %v511
      %v542 = vpop.xlane.xlu0 %541
      %543 = vadd.xlane.f32.xlu0 %v512
      %v544 = vpop.xlane.xlu0 %543
      %v545 = vmul.f32 %v514, 0.03125
      %v546 = vmul.f32 %v516, 0.03125
      %v547 = vmul.f32 %v518, 0.03125
      %v548 = vmul.f32 %v520, 0.03125
      %v549 = vmul.f32 %v522, 0.03125
      %v550 = vmul.f32 %v524, 0.03125
      %v551 = vmul.f32 %v526, 0.03125
      %v552 = vmul.f32 %v528, 0.03125
      %v553 = vmul.f32 %v530, 0.03125
      %v554 = vmul.f32 %v532, 0.03125
      %v555 = vmul.f32 %v534, 0.03125
      %v556 = vmul.f32 %v536, 0.03125
      %v557 = vmul.f32 %v538, 0.03125
      %v558 = vmul.f32 %v540, 0.03125
      %v559 = vmul.f32 %v542, 0.03125
      %v560 = vmul.f32 %v544, 0.03125
      %vm561 = vcmask 7168
      %562 = vst.msk [vmem:[%s224] sm:$0xff] %vm561, %v545
      %563 = vst.msk [vmem:[%s224 + $0x8] sm:$0xff] %vm561, %v546
      %564 = vst.msk [vmem:[%s224 + $0x10] sm:$0xff] %vm561, %v547
      %565 = vst.msk [vmem:[%s224 + $0x18] sm:$0xff] %vm561, %v548
      %566 = vst.msk [vmem:[%s224 + $0x20] sm:$0xff] %vm561, %v549
      %567 = vst.msk [vmem:[%s224 + $0x28] sm:$0xff] %vm561, %v550
      %568 = vst.msk [vmem:[%s224 + $0x30] sm:$0xff] %vm561, %v551
      %569 = vst.msk [vmem:[%s224 + $0x38] sm:$0xff] %vm561, %v552
      %570 = vst.msk [vmem:[%s224 + $0x40] sm:$0xff] %vm561, %v553
      %571 = vst.msk [vmem:[%s224 + $0x48] sm:$0xff] %vm561, %v554
      %572 = vst.msk [vmem:[%s224 + $0x50] sm:$0xff] %vm561, %v555
      %573 = vst.msk [vmem:[%s224 + $0x58] sm:$0xff] %vm561, %v556
      %574 = vst.msk [vmem:[%s224 + $0x60] sm:$0xff] %vm561, %v557
      %575 = vst.msk [vmem:[%s224 + $0x68] sm:$0xff] %vm561, %v558
      %576 = vst.msk [vmem:[%s224 + $0x70] sm:$0xff] %vm561, %v559
      %577 = vst.msk [vmem:[%s224 + $0x78] sm:$0xff] %vm561, %v560
      %s578 = smul.u32 16, %s15
      %p579 = scmp.lt.s32.totalorder %s578, 31
      %s580 = scalar_select %p579, %s578, 31
      %s581 = smul.addr %s580, 8
      %s582 = scalar_lea.vmem %s4, %s581
      // Predicated region
      $region37: #{patch_semantic_loss_batched.1} parent=35 // pred_check
        %p583 = pneg %p127
      $region38: #{patch_semantic_loss_batched.1} parent=35 // pred_check_branch
        %585 = sbr.rel (%p583) target = $region40
      $region39: #{patch_semantic_loss_batched.1} parent=35 // pred_region
        %s586 = smul.u32 16, %s15
      $region40: #{patch_semantic_loss_batched.1} parent=35 // pred_fallthru
        _
    $region36: #{patch_semantic_loss_batched.1} parent=5 // pred_fallthru
      _
    %p587 = scmp.le.s32.totalorder 2, %s10
    // Predicated region
    $region41: #{patch_semantic_loss_batched.1} parent=5 // pred_check
      %p588 = pneg %p587
    $region42: #{patch_semantic_loss_batched.1} parent=5 // pred_check_branch
      %590 = sbr.rel (%p588) target = $region44
    $region43: #{patch_semantic_loss_batched.1} parent=5 // pred_region
      %s591 = ssub.s32 %s10, 2
      // Predicated region
      $region45: #{patch_semantic_loss_batched.1} parent=43 // pred_check
        %p592 = pneg %p133
      $region46: #{patch_semantic_loss_batched.1} parent=43 // pred_check_branch
        %594 = sbr.rel (%p592) target = $region48
      $region47: #{patch_semantic_loss_batched.1} parent=43 // pred_region
        %s595 = smul.u32 16, %s16
        %p596 = scmp.lt.s32.totalorder %s595, 31
        %s597 = scalar_select %p596, %s595, 31
        %s598 = smul.addr %s597, 8
        %s599 = scalar_lea.vmem %s4, %s598
      $region48: #{patch_semantic_loss_batched.1} parent=43 // pred_fallthru
        _
    $region44: #{patch_semantic_loss_batched.1} parent=5 // pred_fallthru
      _
  $region6: #{patch_semantic_loss_batched.1} parent=0 // loop_footer
    %s14 = sadd.s32 1, %s10
  $region7: #{patch_semantic_loss_batched.1} parent=0 // loop_footer_branch
    %9 = sbr.rel target = $region3
  $region8: #{patch_semantic_loss_batched.1} parent=0 // loop_exit
    _

</llo_original>
